<compile_context>
chip_gen: v5e
topology: v5e:2x2
jax: 0.10.0
libtpu: 0.0.40
codegen_flags: <defaults>
</compile_context>

<pallas_src>
import functools
import math

import jax
import jax.numpy as jnp
from jax.experimental import pallas as pl
from jax.experimental.pallas import tpu as pltpu

_HI = jax.lax.Precision.HIGHEST  # reference-only precision


def _const_index_map(ndim):
    def imap(i):
        return (0,) * ndim
    return imap


def _full_spec(arr):
    """Whole-array block, constant index (weights resident in VMEM)."""
    return pl.BlockSpec(arr.shape, _const_index_map(arr.ndim))


# ----------------------- kernel A: embedding + GCN stack -----------------------

def _gcn_stack_kernel(z_ref, emb_ref, adj_ref, *refs, num_convs, max_z):
    out_ref = refs[-1]
    wb_refs = refs[:-1]
    n = adj_ref.shape[0]

    # z_embedding lookup as a one-hot matmul (MXU friendly, fused in-kernel).
    z = z_ref[...]                                               # (N, 1) int32
    ids = jax.lax.broadcasted_iota(jnp.int32, (n, max_z), 1)
    onehot = (ids == z).astype(jnp.float32)                      # (N, max_z)
    h = jnp.dot(onehot, emb_ref[...], preferred_element_type=jnp.float32)

    adj = adj_ref[...]                                           # (N, N) = Â
    hs = []
    for l in range(num_convs):
        w = wb_refs[2 * l][...]
        b = wb_refs[2 * l + 1][...]
        ah = jnp.dot(adj, h, preferred_element_type=jnp.float32)
        h = jnp.tanh(jnp.dot(ah, w, preferred_element_type=jnp.float32) + b)
        hs.append(h)
    # torch: x = torch.cat(xs[1:], dim=-1)
    out_ref[...] = jnp.concatenate(hs, axis=-1).astype(out_ref.dtype)


def gcn_stack_pallas(z, emb, adj, conv_params):
    n = adj.shape[0]
    max_z, _ = emb.shape
    out_dim = sum(w.shape[1] for (w, _) in conv_params)

    z2 = z.reshape(n, 1).astype(jnp.int32)
    flat = []
    for (w, b) in conv_params:
        flat.append(w)
        flat.append(b.reshape(1, -1))
    args = (z2, emb, adj, *flat)

    kernel = functools.partial(
        _gcn_stack_kernel, num_convs=len(conv_params), max_z=max_z)
    return pl.pallas_call(
        kernel,
        out_shape=jax.ShapeDtypeStruct((n, out_dim), jnp.float32),
        grid=(1,),
        in_specs=[_full_spec(a) for a in args],
        out_specs=pl.BlockSpec((n, out_dim), _const_index_map(2)),
        compiler_params=pltpu.CompilerParams(
            dimension_semantics=("arbitrary",)),
    )(*args)


# ------------------- kernel B: conv1d / maxpool / conv1d / MLP head -------------------

def _head_kernel(x_ref, w1_ref, b1_ref, w2_ref, b2_ref,
                 wl1_ref, bl1_ref, wl2_ref, bl2_ref, o_ref, *,
                 num_graphs, k):
    ksz = w2_ref.shape[0]              # conv2 kernel size (5)
    l1 = k // 2                        # MaxPool1d(2, 2) output length
    l2 = l1 - ksz + 1                  # Conv1d(16, 32, 5, 1) output length

    x = x_ref[...]                                               # (B*k, D)
    # conv1 = Conv1d(1, 16, D, stride=D) on (B, 1, k*D)  ==  per-row Linear D->16.
    h1 = jnp.dot(x, w1_ref[...], preferred_element_type=jnp.float32) + b1_ref[...]
    h1 = jnp.maximum(h1, 0.0)                                    # (B*k, 16)

    rows = []
    for b in range(num_graphs):
        hb = h1[b * k:(b + 1) * k, :]                            # (k, 16)
        # MaxPool1d(2, 2) along the sorted-node-position axis.
        pooled = [jnp.maximum(hb[2 * t:2 * t + 1, :], hb[2 * t + 1:2 * t + 2, :])
                  for t in range(l1)]
        pb = jnp.concatenate(pooled, axis=0)                     # (l1, 16)
        # conv2 as a sum of `ksz` tap matmuls, then ReLU.
        feats = []
        for t in range(l2):
            acc = b2_ref[...]                                    # (1, 32)
            for j in range(ksz):
                acc = acc + jnp.dot(pb[t + j:t + j + 1, :], w2_ref[j],
                                    preferred_element_type=jnp.float32)
            feats.append(jnp.maximum(acc, 0.0))
        # TODO(synk): flatten is position-major here; torch's x.view(B,-1) is
        # channel-major — identical when l2 == 1 (this model's dense_dim setup),
        # otherwise lin1 rows would need the corresponding permutation.
        rows.append(jnp.concatenate(feats, axis=1))              # (1, l2*32)
    flat = jnp.concatenate(rows, axis=0)                         # (B, dense_dim)

    h = jnp.dot(flat, wl1_ref[...], preferred_element_type=jnp.float32) + bl1_ref[...]
    h = jnp.maximum(h, 0.0)                                      # lin1 + relu
    # F.dropout(p=0.5): identity in eval mode.
    o_ref[...] = (jnp.dot(h, wl2_ref[...], preferred_element_type=jnp.float32)
                  + bl2_ref[...]).astype(o_ref.dtype)            # lin2 -> (B, 1)


def dgcnn_head_pallas(pooled, head_params, k):
    num_graphs, _, d = pooled.shape
    (w1, b1), (w2, b2), (wl1, bl1), (wl2, bl2) = head_params
    x2d = pooled.reshape(num_graphs * k, d)
    args = (x2d, w1, b1.reshape(1, -1), w2, b2.reshape(1, -1),
            wl1, bl1.reshape(1, -1), wl2, bl2.reshape(1, -1))
    kernel = functools.partial(_head_kernel, num_graphs=num_graphs, k=k)
    return pl.pallas_call(
        kernel,
        out_shape=jax.ShapeDtypeStruct((num_graphs, 1), jnp.float32),
        grid=(1,),
        in_specs=[_full_spec(a) for a in args],
        out_specs=pl.BlockSpec((num_graphs, 1), _const_index_map(2)),
        compiler_params=pltpu.CompilerParams(
            dimension_semantics=("arbitrary",)),
    )(*args)


# ------------------------------ JAX-side pieces ------------------------------

def build_normalized_adjacency(edge_index, num_nodes):
    """Dense Â = D^-1/2 (A + I) D^-1/2 (GCNConv normalization, edge_weight=None)."""
    src, dst = edge_index
    a = jnp.zeros((num_nodes, num_nodes), jnp.float32)
    a = a.at[dst, src].set(1.0)                    # message src -> dst
    a = a + jnp.eye(num_nodes, dtype=jnp.float32)  # add_self_loops
    deg = a.sum(axis=1)
    dinv = jnp.where(deg > 0, jax.lax.rsqrt(deg), 0.0)
    return a * dinv[:, None] * dinv[None, :]


def global_sort_pool_jax(x, num_graphs, nodes_per_graph, k):
    """torch_geometric global_sort_pool for equal-size graphs with n >= k."""
    # TODO(synk): per-graph sort/gather has no clean Pallas primitive; plain JAX.
    d = x.shape[-1]
    xb = x.reshape(num_graphs, nodes_per_graph, d)
    order = jnp.argsort(-xb[:, :, -1], axis=1)     # descending by last channel
    idx = jnp.broadcast_to(order[:, :, None], xb.shape)
    xb = jnp.take_along_axis(xb, idx, axis=1)
    return xb[:, :k, :]                            # (B, k, D)


def dgcnn_forward(params, z, adj, num_graphs, nodes_per_graph, k):
    """Full DGCNN forward (eval mode): kernel A -> sort pool -> kernel B."""
    xcat = gcn_stack_pallas(z, params["emb"], adj, params["convs"])
    pooled = global_sort_pool_jax(xcat, num_graphs, nodes_per_graph, k)
    head = (params["conv1"], params["conv2"], params["lin1"], params["lin2"])
    return dgcnn_head_pallas(pooled, head, k)


# --------------------------- pure-JAX references ---------------------------

def gcn_stack_ref(params, z, adj):
    h = params["emb"][z]
    hs = []
    for (w, b) in params["convs"]:
        ah = jnp.dot(adj, h, precision=_HI)
        h = jnp.tanh(jnp.dot(ah, w, precision=_HI) + b)
        hs.append(h)
    return jnp.concatenate(hs, axis=-1)


def head_ref(params, pooled, k):
    (w1, b1), (w2, b2) = params["conv1"], params["conv2"]
    (wl1, bl1), (wl2, bl2) = params["lin1"], params["lin2"]
    h1 = jnp.maximum(jnp.einsum("bkd,dc->bkc", pooled, w1, precision=_HI) + b1, 0.0)
    n_pairs = k // 2
    h1 = jnp.maximum(h1[:, 0:2 * n_pairs:2, :], h1[:, 1:2 * n_pairs:2, :])
    ksz = w2.shape[0]
    l2 = h1.shape[1] - ksz + 1
    feats = []
    for t in range(l2):
        acc = b2
        for j in range(ksz):
            acc = acc + jnp.dot(h1[:, t + j, :], w2[j], precision=_HI)
        feats.append(jnp.maximum(acc, 0.0))
    flat = jnp.concatenate(feats, axis=-1)
    h = jnp.maximum(jnp.dot(flat, wl1, precision=_HI) + bl1, 0.0)
    return jnp.dot(h, wl2, precision=_HI) + bl2


# ------------------------------- param init -------------------------------

def init_dgcnn_params(key, hidden, num_layers, max_z, k):
    conv1d_channels = (16, 32)
    conv2_ks = 5
    total_latent_dim = hidden * num_layers + 1
    l1 = (k - 2) // 2 + 1
    dense_dim = (l1 - conv2_ks + 1) * conv1d_channels[1]

    n_keys = 1 + (num_layers + 1) + 8
    keys = iter(jax.random.split(key, n_keys))

    # torch.nn.Embedding default init: N(0, 1).
    emb = jax.random.normal(next(keys), (max_z, hidden), jnp.float32)

    # GCNConv layers: glorot weights (stored as (in, out)), zero bias.
    conv_dims = [(hidden, hidden)] * num_layers + [(hidden, 1)]
    convs = []
    for (fi, fo) in conv_dims:
        bound = math.sqrt(6.0 / (fi + fo))
        w = jax.random.uniform(next(keys), (fi, fo), jnp.float32, -bound, bound)
        convs.append((w, jnp.zeros((fo,), jnp.float32)))

    # torch Conv1d / Linear default: kaiming_uniform(a=sqrt(5)) -> bound = 1/sqrt(fan_in).
    def lin_init(kw, kb, fan_in, w_shape, b_shape):
        bound = 1.0 / math.sqrt(fan_in)
        w = jax.random.uniform(kw, w_shape, jnp.float32, -bound, bound)
        b = jax.random.uniform(kb, b_shape, jnp.float32, -bound, bound)
        return w, b

    d = total_latent_dim
    # conv1 weight stored as (D, 16) == torch (16, 1, D) transposed.
    conv1 = lin_init(next(keys), next(keys), 1 * d,
                     (d, conv1d_channels[0]), (conv1d_channels[0],))
    # conv2 weight stored as (ks, 16, 32) == torch (32, 16, ks) transposed.
    conv2 = lin_init(next(keys), next(keys), conv1d_channels[0] * conv2_ks,
                     (conv2_ks, conv1d_channels[0], conv1d_channels[1]),
                     (conv1d_channels[1],))
    lin1 = lin_init(next(keys), next(keys), dense_dim, (dense_dim, 128), (128,))
    lin2 = lin_init(next(keys), next(keys), 128, (128, 1), (1,))

    return {"emb": emb, "convs": convs,
            "conv1": conv1, "conv2": conv2, "lin1": lin1, "lin2": lin2}


# ---------------------------------- demo ----------------------------------

if __name__ == "__main__":
    key = jax.random.PRNGKey(0)

    HIDDEN = 32            # hidden_channels
    NUM_LAYERS = 3
    MAX_Z = 128
    K = 10                 # DGCNN k (>1, used as-is); dense_dim = 32 here
    NUM_GRAPHS = 2
    NODES_PER_GRAPH = 12
    N = NUM_GRAPHS * NODES_PER_GRAPH

    k_params, k_z = jax.random.split(key)
    params = init_dgcnn_params(k_params, HIDDEN, NUM_LAYERS, MAX_Z, K)

    # Structural node labels z in [0, max_z).
    z = jax.random.randint(k_z, (N,), 0, MAX_Z, dtype=jnp.int32)

    # Deterministic per-graph edges: ring + distance-2 chords, both directions.
    src, dst = [], []
    for g in range(NUM_GRAPHS):
        base = g * NODES_PER_GRAPH
        for i in range(NODES_PER_GRAPH):
            for step in (1, 2):
                j = (i + step) % NODES_PER_GRAPH
                src += [base + i, base + j]
                dst += [base + j, base + i]
    edge_index = jnp.array([src, dst], dtype=jnp.int32)
    adj = build_normalized_adjacency(edge_index, N)

    # Full forward through both fused Pallas kernels.
    out = jax.block_until_ready(
        dgcnn_forward(params, z, adj, NUM_GRAPHS, NODES_PER_GRAPH, K))
    assert out.shape == (NUM_GRAPHS, 1), out.shape

    # Per-kernel correctness checks against pure-JAX references.
    xcat = jax.block_until_ready(
        gcn_stack_pallas(z, params["emb"], adj, params["convs"]))
    xcat_ref = gcn_stack_ref(params, z, adj)
    assert jnp.allclose(xcat, xcat_ref, atol=2e-3, rtol=2e-3)

    pooled = global_sort_pool_jax(xcat, NUM_GRAPHS, NODES_PER_GRAPH, K)
    head = (params["conv1"], params["conv2"], params["lin1"], params["lin2"])
    out_k = jax.block_until_ready(dgcnn_head_pallas(pooled, head, K))
    out_ref = head_ref(params, pooled, K)
    assert jnp.allclose(out_k, out_ref, atol=2e-3, rtol=2e-3)
    assert jnp.allclose(out, out_k, atol=1e-6, rtol=1e-6)

    print("KERNEL_OK")
</pallas_src>

<mosaic_0001>
module attributes {stable_mosaic.version = 11 : i64} {
  func.func @_gcn_stack_kernel(%arg0: i32, %arg1: memref<24x1xi32, #tpu.memory_space<vmem>>, %arg2: memref<128x32xf32, #tpu.memory_space<vmem>>, %arg3: memref<24x24xf32, #tpu.memory_space<vmem>>, %arg4: memref<32x32xf32, #tpu.memory_space<vmem>>, %arg5: memref<1x32xf32, #tpu.memory_space<vmem>>, %arg6: memref<32x32xf32, #tpu.memory_space<vmem>>, %arg7: memref<1x32xf32, #tpu.memory_space<vmem>>, %arg8: memref<32x32xf32, #tpu.memory_space<vmem>>, %arg9: memref<1x32xf32, #tpu.memory_space<vmem>>, %arg10: memref<32x1xf32, #tpu.memory_space<vmem>>, %arg11: memref<1x1xf32, #tpu.memory_space<vmem>>, %arg12: memref<24x97xf32, #tpu.memory_space<vmem>>) attributes {dimension_semantics = [#tpu.dimension_semantics<arbitrary>], iteration_bounds = array<i64: 1>, scalar_prefetch = 0 : i64, scratch_operands = 0 : i64, tpu.core_type = #tpu.core_type<tc>, window_params = [{pipeline_mode = #tpu.pipeline_mode<synchronous>, transform_indices = @transform_0, window_bounds = array<i64: 24, 1>}, {pipeline_mode = #tpu.pipeline_mode<synchronous>, transform_indices = @transform_1, window_bounds = array<i64: 128, 32>}, {pipeline_mode = #tpu.pipeline_mode<synchronous>, transform_indices = @transform_2, window_bounds = array<i64: 24, 24>}, {pipeline_mode = #tpu.pipeline_mode<synchronous>, transform_indices = @transform_3, window_bounds = array<i64: 32, 32>}, {pipeline_mode = #tpu.pipeline_mode<synchronous>, transform_indices = @transform_4, window_bounds = array<i64: 1, 32>}, {pipeline_mode = #tpu.pipeline_mode<synchronous>, transform_indices = @transform_5, window_bounds = array<i64: 32, 32>}, {pipeline_mode = #tpu.pipeline_mode<synchronous>, transform_indices = @transform_6, window_bounds = array<i64: 1, 32>}, {pipeline_mode = #tpu.pipeline_mode<synchronous>, transform_indices = @transform_7, window_bounds = array<i64: 32, 32>}, {pipeline_mode = #tpu.pipeline_mode<synchronous>, transform_indices = @transform_8, window_bounds = array<i64: 1, 32>}, {pipeline_mode = #tpu.pipeline_mode<synchronous>, transform_indices = @transform_9, window_bounds = array<i64: 32, 1>}, {pipeline_mode = #tpu.pipeline_mode<synchronous>, transform_indices = @transform_10, window_bounds = array<i64: 1, 1>}, {pipeline_mode = #tpu.pipeline_mode<synchronous>, transform_indices = @transform_11, window_bounds = array<i64: 24, 97>}]} {
    %c0 = arith.constant 0 : index
    %c0_0 = arith.constant 0 : index
    %0 = vector.load %arg1[%c0, %c0_0] : memref<24x1xi32, #tpu.memory_space<vmem>>, vector<24x1xi32>
    %1 = tpu.iota {dimensions = array<i32: 1>} : vector<24x128xi32>
    %2 = vector.broadcast %0 : vector<24x1xi32> to vector<24x128xi32>
    %3 = arith.cmpi eq, %1, %2 : vector<24x128xi32>
    %4 = arith.extui %3 : vector<24x128xi1> to vector<24x128xi32>
    %5 = arith.sitofp %4 : vector<24x128xi32> to vector<24x128xf32>
    %c0_1 = arith.constant 0 : index
    %c0_2 = arith.constant 0 : index
    %6 = vector.load %arg2[%c0_1, %c0_2] : memref<128x32xf32, #tpu.memory_space<vmem>>, vector<128x32xf32>
    %cst = arith.constant dense<0.000000e+00> : vector<24x32xf32>
    %7 = tpu.matmul %5, %6, %cst {dimension_numbers = #tpu.dot_dimension_numbers<[1], [0], [0], [1], [0, 0, 1, 1], [], []>} : vector<24x128xf32>, vector<128x32xf32>, vector<24x32xf32> -> vector<24x32xf32>
    %c0_3 = arith.constant 0 : index
    %c0_4 = arith.constant 0 : index
    %8 = vector.load %arg3[%c0_3, %c0_4] : memref<24x24xf32, #tpu.memory_space<vmem>>, vector<24x24xf32>
    %c0_5 = arith.constant 0 : index
    %c0_6 = arith.constant 0 : index
    %9 = vector.load %arg4[%c0_5, %c0_6] : memref<32x32xf32, #tpu.memory_space<vmem>>, vector<32x32xf32>
    %c0_7 = arith.constant 0 : index
    %c0_8 = arith.constant 0 : index
    %10 = vector.load %arg5[%c0_7, %c0_8] : memref<1x32xf32, #tpu.memory_space<vmem>>, vector<1x32xf32>
    %cst_9 = arith.constant dense<0.000000e+00> : vector<24x32xf32>
    %11 = tpu.matmul %8, %7, %cst_9 {dimension_numbers = #tpu.dot_dimension_numbers<[1], [0], [0], [1], [0, 0, 1, 1], [], []>} : vector<24x24xf32>, vector<24x32xf32>, vector<24x32xf32> -> vector<24x32xf32>
    %cst_10 = arith.constant dense<0.000000e+00> : vector<24x32xf32>
    %12 = tpu.matmul %11, %9, %cst_10 {dimension_numbers = #tpu.dot_dimension_numbers<[1], [0], [0], [1], [0, 0, 1, 1], [], []>} : vector<24x32xf32>, vector<32x32xf32>, vector<24x32xf32> -> vector<24x32xf32>
    %13 = vector.broadcast %10 : vector<1x32xf32> to vector<24x32xf32>
    %14 = arith.addf %12, %13 : vector<24x32xf32>
    %15 = math.tanh %14 : vector<24x32xf32>
    %c0_11 = arith.constant 0 : index
    %c0_12 = arith.constant 0 : index
    %16 = vector.load %arg6[%c0_11, %c0_12] : memref<32x32xf32, #tpu.memory_space<vmem>>, vector<32x32xf32>
    %c0_13 = arith.constant 0 : index
    %c0_14 = arith.constant 0 : index
    %17 = vector.load %arg7[%c0_13, %c0_14] : memref<1x32xf32, #tpu.memory_space<vmem>>, vector<1x32xf32>
    %cst_15 = arith.constant dense<0.000000e+00> : vector<24x32xf32>
    %18 = tpu.matmul %8, %15, %cst_15 {dimension_numbers = #tpu.dot_dimension_numbers<[1], [0], [0], [1], [0, 0, 1, 1], [], []>} : vector<24x24xf32>, vector<24x32xf32>, vector<24x32xf32> -> vector<24x32xf32>
    %cst_16 = arith.constant dense<0.000000e+00> : vector<24x32xf32>
    %19 = tpu.matmul %18, %16, %cst_16 {dimension_numbers = #tpu.dot_dimension_numbers<[1], [0], [0], [1], [0, 0, 1, 1], [], []>} : vector<24x32xf32>, vector<32x32xf32>, vector<24x32xf32> -> vector<24x32xf32>
    %20 = vector.broadcast %17 : vector<1x32xf32> to vector<24x32xf32>
    %21 = arith.addf %19, %20 : vector<24x32xf32>
    %22 = math.tanh %21 : vector<24x32xf32>
    %c0_17 = arith.constant 0 : index
    %c0_18 = arith.constant 0 : index
    %23 = vector.load %arg8[%c0_17, %c0_18] : memref<32x32xf32, #tpu.memory_space<vmem>>, vector<32x32xf32>
    %c0_19 = arith.constant 0 : index
    %c0_20 = arith.constant 0 : index
    %24 = vector.load %arg9[%c0_19, %c0_20] : memref<1x32xf32, #tpu.memory_space<vmem>>, vector<1x32xf32>
    %cst_21 = arith.constant dense<0.000000e+00> : vector<24x32xf32>
    %25 = tpu.matmul %8, %22, %cst_21 {dimension_numbers = #tpu.dot_dimension_numbers<[1], [0], [0], [1], [0, 0, 1, 1], [], []>} : vector<24x24xf32>, vector<24x32xf32>, vector<24x32xf32> -> vector<24x32xf32>
    %cst_22 = arith.constant dense<0.000000e+00> : vector<24x32xf32>
    %26 = tpu.matmul %25, %23, %cst_22 {dimension_numbers = #tpu.dot_dimension_numbers<[1], [0], [0], [1], [0, 0, 1, 1], [], []>} : vector<24x32xf32>, vector<32x32xf32>, vector<24x32xf32> -> vector<24x32xf32>
    %27 = vector.broadcast %24 : vector<1x32xf32> to vector<24x32xf32>
    %28 = arith.addf %26, %27 : vector<24x32xf32>
    %29 = math.tanh %28 : vector<24x32xf32>
    %c0_23 = arith.constant 0 : index
    %c0_24 = arith.constant 0 : index
    %30 = vector.load %arg10[%c0_23, %c0_24] : memref<32x1xf32, #tpu.memory_space<vmem>>, vector<32x1xf32>
    %c0_25 = arith.constant 0 : index
    %c0_26 = arith.constant 0 : index
    %31 = vector.load %arg11[%c0_25, %c0_26] : memref<1x1xf32, #tpu.memory_space<vmem>>, vector<1x1xf32>
    %cst_27 = arith.constant dense<0.000000e+00> : vector<24x32xf32>
    %32 = tpu.matmul %8, %29, %cst_27 {dimension_numbers = #tpu.dot_dimension_numbers<[1], [0], [0], [1], [0, 0, 1, 1], [], []>} : vector<24x24xf32>, vector<24x32xf32>, vector<24x32xf32> -> vector<24x32xf32>
    %cst_28 = arith.constant dense<0.000000e+00> : vector<24x1xf32>
    %33 = tpu.matmul %32, %30, %cst_28 {dimension_numbers = #tpu.dot_dimension_numbers<[1], [0], [0], [1], [0, 0, 1, 1], [], []>} : vector<24x32xf32>, vector<32x1xf32>, vector<24x1xf32> -> vector<24x1xf32>
    %34 = vector.broadcast %31 : vector<1x1xf32> to vector<24x1xf32>
    %35 = arith.addf %33, %34 : vector<24x1xf32>
    %36 = math.tanh %35 : vector<24x1xf32>
    %37 = tpu.concatenate %15, %22, %29, %36 in 1 : vector<24x32xf32>, vector<24x32xf32>, vector<24x32xf32>, vector<24x1xf32> -> vector<24x97xf32>
    %c0_29 = arith.constant 0 : index
    %c0_30 = arith.constant 0 : index
    %38 = vector.load %arg12[%c0_29, %c0_30] : memref<24x97xf32, #tpu.memory_space<vmem>>, vector<24x97xf32>
    tpu.vector_store %arg12[%c0_29, %c0_30], %37 {strides = array<i32>} : memref<24x97xf32, #tpu.memory_space<vmem>>, vector<24x97xf32>,
    return
  }
  func.func @transform_0(%arg0: i32) -> (i32, i32) {
    %c0_i32 = arith.constant 0 : i32
    %c0_i32_0 = arith.constant 0 : i32
    %c0_i32_1 = arith.constant 0 : i32
    return %c0_i32, %c0_i32_0 : i32, i32
  }
  func.func @transform_1(%arg0: i32) -> (i32, i32) {
    %c0_i32 = arith.constant 0 : i32
    %c0_i32_0 = arith.constant 0 : i32
    %c0_i32_1 = arith.constant 0 : i32
    return %c0_i32, %c0_i32_0 : i32, i32
  }
  func.func @transform_2(%arg0: i32) -> (i32, i32) {
    %c0_i32 = arith.constant 0 : i32
    %c0_i32_0 = arith.constant 0 : i32
    %c0_i32_1 = arith.constant 0 : i32
    return %c0_i32, %c0_i32_0 : i32, i32
  }
  func.func @transform_3(%arg0: i32) -> (i32, i32) {
    %c0_i32 = arith.constant 0 : i32
    %c0_i32_0 = arith.constant 0 : i32
    %c0_i32_1 = arith.constant 0 : i32
    return %c0_i32, %c0_i32_0 : i32, i32
  }
  func.func @transform_4(%arg0: i32) -> (i32, i32) {
    %c0_i32 = arith.constant 0 : i32
    %c0_i32_0 = arith.constant 0 : i32
    %c0_i32_1 = arith.constant 0 : i32
    return %c0_i32, %c0_i32_0 : i32, i32
  }
  func.func @transform_5(%arg0: i32) -> (i32, i32) {
    %c0_i32 = arith.constant 0 : i32
    %c0_i32_0 = arith.constant 0 : i32
    %c0_i32_1 = arith.constant 0 : i32
    return %c0_i32, %c0_i32_0 : i32, i32
  }
  func.func @transform_6(%arg0: i32) -> (i32, i32) {
    %c0_i32 = arith.constant 0 : i32
    %c0_i32_0 = arith.constant 0 : i32
    %c0_i32_1 = arith.constant 0 : i32
    return %c0_i32, %c0_i32_0 : i32, i32
  }
  func.func @transform_7(%arg0: i32) -> (i32, i32) {
    %c0_i32 = arith.constant 0 : i32
    %c0_i32_0 = arith.constant 0 : i32
    %c0_i32_1 = arith.constant 0 : i32
    return %c0_i32, %c0_i32_0 : i32, i32
  }
  func.func @transform_8(%arg0: i32) -> (i32, i32) {
    %c0_i32 = arith.constant 0 : i32
    %c0_i32_0 = arith.constant 0 : i32
    %c0_i32_1 = arith.constant 0 : i32
    return %c0_i32, %c0_i32_0 : i32, i32
  }
  func.func @transform_9(%arg0: i32) -> (i32, i32) {
    %c0_i32 = arith.constant 0 : i32
    %c0_i32_0 = arith.constant 0 : i32
    %c0_i32_1 = arith.constant 0 : i32
    return %c0_i32, %c0_i32_0 : i32, i32
  }
  func.func @transform_10(%arg0: i32) -> (i32, i32) {
    %c0_i32 = arith.constant 0 : i32
    %c0_i32_0 = arith.constant 0 : i32
    %c0_i32_1 = arith.constant 0 : i32
    return %c0_i32, %c0_i32_0 : i32, i32
  }
  func.func @transform_11(%arg0: i32) -> (i32, i32) {
    %c0_i32 = arith.constant 0 : i32
    %c0_i32_0 = arith.constant 0 : i32
    %c0_i32_1 = arith.constant 0 : i32
    return %c0_i32, %c0_i32_0 : i32, i32
  }
}

</mosaic_0001>

<llo_original>
// kernel: tpu_custom_call.1
$region0: #{tpu_custom_call.1}
  #allocation0 [shape = 'u32[]', space=smem, size = 0x4, offset = 0x4, fixed_abs, tag = 'smem constant byte address 0x4 - core index']
  #allocation1 [shape = 'u32[72,128]{1,0:T(1,128)}', space=vmem, size = 0x9000, scoped, tag = 'internal scratch']
  #allocation2 [shape = 'f32[1,1]{1,0:T(1,128)S(1)}', space=vmem, size = 0x200, scoped, tag = 'scoped memory for tpu_custom_call.1']
  %s0 = inlined_call_operand.vmem [shape: s32[24,1], index: 0, kind: input, shape index: {}]
  %s1 = inlined_call_operand.vmem [shape: f32[128,32], index: 1, kind: input, shape index: {}]
  %s2 = inlined_call_operand.vmem [shape: f32[24,24], index: 2, kind: input, shape index: {}]
  %s3 = inlined_call_operand.vmem [shape: f32[32,32], index: 3, kind: input, shape index: {}]
  %s4 = inlined_call_operand.vmem [shape: f32[1,32], index: 4, kind: input, shape index: {}]
  %s5 = inlined_call_operand.vmem [shape: f32[32,32], index: 5, kind: input, shape index: {}]
  %s6 = inlined_call_operand.vmem [shape: f32[1,32], index: 6, kind: input, shape index: {}]
  %s7 = inlined_call_operand.vmem [shape: f32[32,32], index: 7, kind: input, shape index: {}]
  %s8 = inlined_call_operand.vmem [shape: f32[1,32], index: 8, kind: input, shape index: {}]
  %s9 = inlined_call_operand.vmem [shape: f32[32,1], index: 9, kind: input, shape index: {}]
  %s10 = inlined_call_operand.<no memory space> [shape: f32[1,1], index: 10, kind: input, shape index: {}]
  %s11 = inlined_call_operand.hbm [shape: f32[24,97], index: 11, kind: output, shape index: {}]
  %s12 = sld [smem:[#allocation0]]
  $region54: #{tpu_custom_call.1} parent=0
    _
  %s14 = ssub.s32 1, %s12
  %s15 = scalar_select 0, %s14, %s12
  %v16 = vstv %s10
  %17 = vst [vmem:[#allocation2] sm:$0x1] %v16
  $region1: #{tpu_custom_call.1} parent=0
    #allocation3 [shape = 'u8[12288]{0}', space=vmem, size = 0x3000, scoped, tag = 'output window, operand 0, single buffered']
    #allocation4 [shape = 's32[1]{0}', space=sflag, size = 0x4, scoped, tag = 'scoped memory for tpu_custom_call.1']
    %18 = vsyncpa [#allocation4], 0
    // Predicated region
    $region2: #{tpu_custom_call.1} parent=1 // pred_check
      _
    $region3: #{tpu_custom_call.1} parent=1 // pred_check_branch
      %20 = sbr.rel (0) target = $region5
    $region4: #{tpu_custom_call.1} parent=1 // pred_region
      _
    $region5: #{tpu_custom_call.1} parent=1 // pred_fallthru
      _
    // Predicated region
    $region6: #{tpu_custom_call.1} parent=1 // pred_check
      _
    $region7: #{tpu_custom_call.1} parent=1 // pred_check_branch
      %22 = sbr.rel (0) target = $region9
    $region8: #{tpu_custom_call.1} parent=1 // pred_region
      _
    $region9: #{tpu_custom_call.1} parent=1 // pred_fallthru
      _
    // Predicated region
    $region10: #{tpu_custom_call.1} parent=1 // pred_check
      _
    $region11: #{tpu_custom_call.1} parent=1 // pred_check_branch
      %24 = sbr.rel (0) target = $region13
    $region12: #{tpu_custom_call.1} parent=1 // pred_region
      _
    $region13: #{tpu_custom_call.1} parent=1 // pred_fallthru
      _
    // Predicated region
    $region14: #{tpu_custom_call.1} parent=1 // pred_check
      _
    $region15: #{tpu_custom_call.1} parent=1 // pred_check_branch
      %26 = sbr.rel (0) target = $region17
    $region16: #{tpu_custom_call.1} parent=1 // pred_region
      _
    $region17: #{tpu_custom_call.1} parent=1 // pred_fallthru
      _
    // Predicated region
    $region18: #{tpu_custom_call.1} parent=1 // pred_check
      _
    $region19: #{tpu_custom_call.1} parent=1 // pred_check_branch
      %28 = sbr.rel (0) target = $region21
    $region20: #{tpu_custom_call.1} parent=1 // pred_region
      _
    $region21: #{tpu_custom_call.1} parent=1 // pred_fallthru
      _
    // Predicated region
    $region22: #{tpu_custom_call.1} parent=1 // pred_check
      _
    $region23: #{tpu_custom_call.1} parent=1 // pred_check_branch
      %30 = sbr.rel (0) target = $region25
    $region24: #{tpu_custom_call.1} parent=1 // pred_region
      _
    $region25: #{tpu_custom_call.1} parent=1 // pred_fallthru
      _
    // Predicated region
    $region26: #{tpu_custom_call.1} parent=1 // pred_check
      _
    $region27: #{tpu_custom_call.1} parent=1 // pred_check_branch
      %32 = sbr.rel (0) target = $region29
    $region28: #{tpu_custom_call.1} parent=1 // pred_region
      _
    $region29: #{tpu_custom_call.1} parent=1 // pred_fallthru
      _
    // Predicated region
    $region30: #{tpu_custom_call.1} parent=1 // pred_check
      _
    $region31: #{tpu_custom_call.1} parent=1 // pred_check_branch
      %34 = sbr.rel (0) target = $region33
    $region32: #{tpu_custom_call.1} parent=1 // pred_region
      _
    $region33: #{tpu_custom_call.1} parent=1 // pred_fallthru
      _
    // Predicated region
    $region34: #{tpu_custom_call.1} parent=1 // pred_check
      _
    $region35: #{tpu_custom_call.1} parent=1 // pred_check_branch
      %36 = sbr.rel (0) target = $region37
    $region36: #{tpu_custom_call.1} parent=1 // pred_region
      _
    $region37: #{tpu_custom_call.1} parent=1 // pred_fallthru
      _
    // Predicated region
    $region38: #{tpu_custom_call.1} parent=1 // pred_check
      _
    $region39: #{tpu_custom_call.1} parent=1 // pred_check_branch
      %38 = sbr.rel (0) target = $region41
    $region40: #{tpu_custom_call.1} parent=1 // pred_region
      _
    $region41: #{tpu_custom_call.1} parent=1 // pred_fallthru
      _
    // Predicated region
    $region42: #{tpu_custom_call.1} parent=1 // pred_check
      _
    $region43: #{tpu_custom_call.1} parent=1 // pred_check_branch
      %40 = sbr.rel (0) target = $region45
    $region44: #{tpu_custom_call.1} parent=1 // pred_region
      _
    $region45: #{tpu_custom_call.1} parent=1 // pred_fallthru
      _
    %v41 = vld [vmem:[%s0] sm:$0xff]
    %v42 = vld [vmem:[%s0 + $0x8] sm:$0xff]
    %v43 = vld [vmem:[%s0 + $0x10] sm:$0xff]
    %v44 = vlaneseq
    %v45 = vand.u32 %v44, 127
    %46 = vset.pattern.permute.xlu0 0
    %47 = vperm.xlu0 %46, %v41
    %v48 = vpop.permute.xlu0 %47
    %49 = vset.pattern.permute.xlu0 0
    %50 = vperm.xlu0 %49, %v42
    %v51 = vpop.permute.xlu0 %50
    %52 = vset.pattern.permute.xlu0 0
    %53 = vperm.xlu0 %52, %v43
    %v54 = vpop.permute.xlu0 %53
    %vm55 = vcmp.eq.s32.totalorder %v45, %v48
    %vm56 = vcmp.eq.s32.totalorder %v45, %v51
    %vm57 = vcmp.eq.s32.totalorder %v45, %v54
    %v58 = vsel %vm55, 1, 0
    %v59 = vsel %vm56, 1, 0
    %v60 = vsel %vm57, 1, 0
    %v61 = vcvt.s32.f32 %v58
    %v62 = vcvt.s32.f32 %v59
    %v63 = vcvt.s32.f32 %v60
    %v64 = vld [vmem:[%s1] sm:$0xff]
    %v65 = vld [vmem:[%s1 + $0x8] sm:$0xff]
    %v66 = vld [vmem:[%s1 + $0x10] sm:$0xff]
    %v67 = vld [vmem:[%s1 + $0x18] sm:$0xff]
    %v68 = vld [vmem:[%s1 + $0x20] sm:$0xff]
    %v69 = vld [vmem:[%s1 + $0x28] sm:$0xff]
    %v70 = vld [vmem:[%s1 + $0x30] sm:$0xff]
    %v71 = vld [vmem:[%s1 + $0x38] sm:$0xff]
    %v72 = vld [vmem:[%s1 + $0x40] sm:$0xff]
    %v73 = vld [vmem:[%s1 + $0x48] sm:$0xff]
    %v74 = vld [vmem:[%s1 + $0x50] sm:$0xff]
    %v75 = vld [vmem:[%s1 + $0x58] sm:$0xff]
    %v76 = vld [vmem:[%s1 + $0x60] sm:$0xff]
    %v77 = vld [vmem:[%s1 + $0x68] sm:$0xff]
    %v78 = vld [vmem:[%s1 + $0x70] sm:$0xff]
    %v79 = vld [vmem:[%s1 + $0x78] sm:$0xff]
    %80 = vmatpush.msra.mxu0 %v79
    %81 = vmatpush.msra.mxu0 %v78
    %82 = vmatpush.msra.mxu0 %v77
    %83 = vmatpush.msra.mxu0 %v76
    %84 = vmatpush.msra.mxu0 %v75
    %85 = vmatpush.msra.mxu0 %v74
    %86 = vmatpush.msra.mxu0 %v73
    %87 = vmatpush.msra.mxu0 %v72
    %88 = vmatpush.msra.mxu0 %v71
    %89 = vmatpush.msra.mxu0 %v70
    %90 = vmatpush.msra.mxu0 %v69
    %91 = vmatpush.msra.mxu0 %v68
    %92 = vmatpush.msra.mxu0 %v67
    %93 = vmatpush.msra.mxu0 %v66
    %94 = vmatpush.msra.mxu0 %v65
    %95 = vmatpush.msra.mxu0 %v64
    %96 = vmatmul.f32.gmra.mxu0 %v61
    %v97 = vpop.f32.mrf.mxu0
    %v98 = vadd.f32 0.0, %v97
    %99 = vmatmul.f32.gmra.mxu0 %v62
    %v100 = vpop.f32.mrf.mxu0
    %v101 = vadd.f32 0.0, %v100
    %102 = vmatmul.f32.gmra.mxu0 %v63
    %v103 = vpop.f32.mrf.mxu0
    %v104 = vadd.f32 0.0, %v103
    %105 = vdwg.mxu0
    %v106 = vld [vmem:[%s2] sm:$0xff]
    %v107 = vld [vmem:[%s2 + $0x8] sm:$0xff]
    %v108 = vld [vmem:[%s2 + $0x10] sm:$0xff]
    %v109 = vld [vmem:[%s3] sm:$0xff]
    %v110 = vld [vmem:[%s3 + $0x8] sm:$0xff]
    %v111 = vld [vmem:[%s3 + $0x10] sm:$0xff]
    %v112 = vld [vmem:[%s3 + $0x18] sm:$0xff]
    %v113 = vld [vmem:[%s4] sm:$0x1]
    %vm114 = vcmask 195584
    %v116 = vsel %vm114, %v106, 0
    %v119 = vsel %vm114, %v107, 0
    %v122 = vsel %vm114, %v108, 0
    %124 = vmatpush.msra.mxu0 0.0
    %125 = vmatpush.msra.mxu0 0.0
    %126 = vmatpush.msra.mxu0 0.0
    %127 = vmatpush.msra.mxu0 0.0
    %128 = vmatpush.msra.mxu0 0.0
    %129 = vmatpush.msra.mxu0 0.0
    %130 = vmatpush.msra.mxu0 0.0
    %131 = vmatpush.msra.mxu0 0.0
    %132 = vmatpush.msra.mxu0 0.0
    %133 = vmatpush.msra.mxu0 0.0
    %134 = vmatpush.msra.mxu0 0.0
    %135 = vmatpush.msra.mxu0 0.0
    %136 = vmatpush.msra.mxu0 0.0
    %137 = vmatpush.msra.mxu0 %v104
    %138 = vmatpush.msra.mxu0 %v101
    %139 = vmatpush.msra.mxu0 %v98
    %140 = vmatmul.f32.gmra.mxu0 %v116
    %v141 = vpop.f32.mrf.mxu0
    %v142 = vadd.f32 0.0, %v141
    %143 = vmatmul.f32.gmra.mxu0 %v119
    %v144 = vpop.f32.mrf.mxu0
    %v145 = vadd.f32 0.0, %v144
    %146 = vmatmul.f32.gmra.mxu0 %v122
    %v147 = vpop.f32.mrf.mxu0
    %v148 = vadd.f32 0.0, %v147
    %149 = vdwg.mxu0
    %v151 = vperm.slane %v113, 0
    %vm153 = vcmask 261120
    %v155 = vsel %vm153, %v142, 0
    %v158 = vsel %vm153, %v145, 0
    %v161 = vsel %vm153, %v148, 0
    %163 = vmatpush.msra.mxu0 0.0
    %164 = vmatpush.msra.mxu0 0.0
    %165 = vmatpush.msra.mxu0 0.0
    %166 = vmatpush.msra.mxu0 0.0
    %167 = vmatpush.msra.mxu0 0.0
    %168 = vmatpush.msra.mxu0 0.0
    %169 = vmatpush.msra.mxu0 0.0
    %170 = vmatpush.msra.mxu0 0.0
    %171 = vmatpush.msra.mxu0 0.0
    %172 = vmatpush.msra.mxu0 0.0
    %173 = vmatpush.msra.mxu0 0.0
    %174 = vmatpush.msra.mxu0 0.0
    %175 = vmatpush.msra.mxu0 %v112
    %176 = vmatpush.msra.mxu0 %v111
    %177 = vmatpush.msra.mxu0 %v110
    %178 = vmatpush.msra.mxu0 %v109
    %179 = vmatmul.f32.gmra.mxu0 %v155
    %v180 = vpop.f32.mrf.mxu0
    %v181 = vadd.f32 %v151, %v180
    %182 = vmatmul.f32.gmra.mxu0 %v158
    %v183 = vpop.f32.mrf.mxu0
    %v184 = vadd.f32 %v151, %v183
    %185 = vmatmul.f32.gmra.mxu0 %v161
    %v186 = vpop.f32.mrf.mxu0
    %v187 = vadd.f32 %v151, %v186
    %188 = vdwg.mxu0
    %v189 = vtanh.pop %v181
    %v190 = vtanh.pop %v184
    %v191 = vtanh.pop %v187
    %v192 = vld [vmem:[%s5] sm:$0xff]
    %v193 = vld [vmem:[%s5 + $0x8] sm:$0xff]
    %v194 = vld [vmem:[%s5 + $0x10] sm:$0xff]
    %v195 = vld [vmem:[%s5 + $0x18] sm:$0xff]
    %v196 = vld [vmem:[%s6] sm:$0x1]
    %197 = vmatpush.msra.mxu0 0.0
    %198 = vmatpush.msra.mxu0 0.0
    %199 = vmatpush.msra.mxu0 0.0
    %200 = vmatpush.msra.mxu0 0.0
    %201 = vmatpush.msra.mxu0 0.0
    %202 = vmatpush.msra.mxu0 0.0
    %203 = vmatpush.msra.mxu0 0.0
    %204 = vmatpush.msra.mxu0 0.0
    %205 = vmatpush.msra.mxu0 0.0
    %206 = vmatpush.msra.mxu0 0.0
    %207 = vmatpush.msra.mxu0 0.0
    %208 = vmatpush.msra.mxu0 0.0
    %209 = vmatpush.msra.mxu0 0.0
    %210 = vmatpush.msra.mxu0 %v191
    %211 = vmatpush.msra.mxu0 %v190
    %212 = vmatpush.msra.mxu0 %v189
    %213 = vmatmul.f32.gmra.mxu0 %v116
    %v214 = vpop.f32.mrf.mxu0
    %v215 = vadd.f32 0.0, %v214
    %216 = vmatmul.f32.gmra.mxu0 %v119
    %v217 = vpop.f32.mrf.mxu0
    %v218 = vadd.f32 0.0, %v217
    %219 = vmatmul.f32.gmra.mxu0 %v122
    %v220 = vpop.f32.mrf.mxu0
    %v221 = vadd.f32 0.0, %v220
    %222 = vdwg.mxu0
    %v224 = vperm.slane %v196, 0
    %v227 = vsel %vm153, %v215, 0
    %v230 = vsel %vm153, %v218, 0
    %v233 = vsel %vm153, %v221, 0
    %235 = vmatpush.msra.mxu0 0.0
    %236 = vmatpush.msra.mxu0 0.0
    %237 = vmatpush.msra.mxu0 0.0
    %238 = vmatpush.msra.mxu0 0.0
    %239 = vmatpush.msra.mxu0 0.0
    %240 = vmatpush.msra.mxu0 0.0
    %241 = vmatpush.msra.mxu0 0.0
    %242 = vmatpush.msra.mxu0 0.0
    %243 = vmatpush.msra.mxu0 0.0
    %244 = vmatpush.msra.mxu0 0.0
    %245 = vmatpush.msra.mxu0 0.0
    %246 = vmatpush.msra.mxu0 0.0
    %247 = vmatpush.msra.mxu0 %v195
    %248 = vmatpush.msra.mxu0 %v194
    %249 = vmatpush.msra.mxu0 %v193
    %250 = vmatpush.msra.mxu0 %v192
    %251 = vmatmul.f32.gmra.mxu0 %v227
    %v252 = vpop.f32.mrf.mxu0
    %v253 = vadd.f32 %v224, %v252
    %254 = vmatmul.f32.gmra.mxu0 %v230
    %v255 = vpop.f32.mrf.mxu0
    %v256 = vadd.f32 %v224, %v255
    %257 = vmatmul.f32.gmra.mxu0 %v233
    %v258 = vpop.f32.mrf.mxu0
    %v259 = vadd.f32 %v224, %v258
    %260 = vdwg.mxu0
    %v261 = vtanh.pop %v253
    %v262 = vtanh.pop %v256
    %v263 = vtanh.pop %v259
    %v264 = vld [vmem:[%s7] sm:$0xff]
    %v265 = vld [vmem:[%s7 + $0x8] sm:$0xff]
    %v266 = vld [vmem:[%s7 + $0x10] sm:$0xff]
    %v267 = vld [vmem:[%s7 + $0x18] sm:$0xff]
    %v268 = vld [vmem:[%s8] sm:$0x1]
    %269 = vmatpush.msra.mxu0 0.0
    %270 = vmatpush.msra.mxu0 0.0
    %271 = vmatpush.msra.mxu0 0.0
    %272 = vmatpush.msra.mxu0 0.0
    %273 = vmatpush.msra.mxu0 0.0
    %274 = vmatpush.msra.mxu0 0.0
    %275 = vmatpush.msra.mxu0 0.0
    %276 = vmatpush.msra.mxu0 0.0
    %277 = vmatpush.msra.mxu0 0.0
    %278 = vmatpush.msra.mxu0 0.0
    %279 = vmatpush.msra.mxu0 0.0
    %280 = vmatpush.msra.mxu0 0.0
    %281 = vmatpush.msra.mxu0 0.0
    %282 = vmatpush.msra.mxu0 %v263
    %283 = vmatpush.msra.mxu0 %v262
    %284 = vmatpush.msra.mxu0 %v261
    %285 = vmatmul.f32.gmra.mxu0 %v116
    %v286 = vpop.f32.mrf.mxu0
    %v287 = vadd.f32 0.0, %v286
    %288 = vmatmul.f32.gmra.mxu0 %v119
    %v289 = vpop.f32.mrf.mxu0
    %v290 = vadd.f32 0.0, %v289
    %291 = vmatmul.f32.gmra.mxu0 %v122
    %v292 = vpop.f32.mrf.mxu0
    %v293 = vadd.f32 0.0, %v292
    %294 = vdwg.mxu0
    %v296 = vperm.slane %v268, 0
    %v299 = vsel %vm153, %v287, 0
    %v302 = vsel %vm153, %v290, 0
    %v305 = vsel %vm153, %v293, 0
    %307 = vmatpush.msra.mxu0 0.0
    %308 = vmatpush.msra.mxu0 0.0
    %309 = vmatpush.msra.mxu0 0.0
    %310 = vmatpush.msra.mxu0 0.0
    %311 = vmatpush.msra.mxu0 0.0
    %312 = vmatpush.msra.mxu0 0.0
    %313 = vmatpush.msra.mxu0 0.0
    %314 = vmatpush.msra.mxu0 0.0
    %315 = vmatpush.msra.mxu0 0.0
    %316 = vmatpush.msra.mxu0 0.0
    %317 = vmatpush.msra.mxu0 0.0
    %318 = vmatpush.msra.mxu0 0.0
    %319 = vmatpush.msra.mxu0 %v267
    %320 = vmatpush.msra.mxu0 %v266
    %321 = vmatpush.msra.mxu0 %v265
    %322 = vmatpush.msra.mxu0 %v264
    %323 = vmatmul.f32.gmra.mxu0 %v299
    %v324 = vpop.f32.mrf.mxu0
    %v325 = vadd.f32 %v296, %v324
    %326 = vmatmul.f32.gmra.mxu0 %v302
    %v327 = vpop.f32.mrf.mxu0
    %v328 = vadd.f32 %v296, %v327
    %329 = vmatmul.f32.gmra.mxu0 %v305
    %v330 = vpop.f32.mrf.mxu0
    %v331 = vadd.f32 %v296, %v330
    %332 = vdwg.mxu0
    %v333 = vtanh.pop %v325
    %v334 = vtanh.pop %v328
    %v335 = vtanh.pop %v331
    %v336 = vld [vmem:[%s9] sm:$0xff]
    %v337 = vld [vmem:[%s9 + $0x8] sm:$0xff]
    %v338 = vld [vmem:[%s9 + $0x10] sm:$0xff]
    %v339 = vld [vmem:[%s9 + $0x18] sm:$0xff]
    %v340 = vld [vmem:[#allocation2] sm:$0x1]
    %341 = vmatpush.msra.mxu0 0.0
    %342 = vmatpush.msra.mxu0 0.0
    %343 = vmatpush.msra.mxu0 0.0
    %344 = vmatpush.msra.mxu0 0.0
    %345 = vmatpush.msra.mxu0 0.0
    %346 = vmatpush.msra.mxu0 0.0
    %347 = vmatpush.msra.mxu0 0.0
    %348 = vmatpush.msra.mxu0 0.0
    %349 = vmatpush.msra.mxu0 0.0
    %350 = vmatpush.msra.mxu0 0.0
    %351 = vmatpush.msra.mxu0 0.0
    %352 = vmatpush.msra.mxu0 0.0
    %353 = vmatpush.msra.mxu0 0.0
    %354 = vmatpush.msra.mxu0 %v335
    %355 = vmatpush.msra.mxu0 %v334
    %356 = vmatpush.msra.mxu0 %v333
    %357 = vmatmul.f32.gmra.mxu0 %v116
    %v358 = vpop.f32.mrf.mxu0
    %v359 = vadd.f32 0.0, %v358
    %360 = vmatmul.f32.gmra.mxu0 %v119
    %v361 = vpop.f32.mrf.mxu0
    %v362 = vadd.f32 0.0, %v361
    %363 = vmatmul.f32.gmra.mxu0 %v122
    %v364 = vpop.f32.mrf.mxu0
    %v365 = vadd.f32 0.0, %v364
    %366 = vdwg.mxu0
    %v368 = vperm.slane %v340, 0
    %v371 = vsel %vm153, %v359, 0
    %v374 = vsel %vm153, %v362, 0
    %v377 = vsel %vm153, %v365, 0
    %379 = vmatpush.msra.mxu0 0.0
    %380 = vmatpush.msra.mxu0 0.0
    %381 = vmatpush.msra.mxu0 0.0
    %382 = vmatpush.msra.mxu0 0.0
    %383 = vmatpush.msra.mxu0 0.0
    %384 = vmatpush.msra.mxu0 0.0
    %385 = vmatpush.msra.mxu0 0.0
    %386 = vmatpush.msra.mxu0 0.0
    %387 = vmatpush.msra.mxu0 0.0
    %388 = vmatpush.msra.mxu0 0.0
    %389 = vmatpush.msra.mxu0 0.0
    %390 = vmatpush.msra.mxu0 0.0
    %391 = vmatpush.msra.mxu0 %v339
    %392 = vmatpush.msra.mxu0 %v338
    %393 = vmatpush.msra.mxu0 %v337
    %394 = vmatpush.msra.mxu0 %v336
    %395 = vmatmul.f32.gmra.mxu0 %v371
    %v396 = vpop.f32.mrf.mxu0
    %v397 = vadd.f32 %v368, %v396
    %398 = vmatmul.f32.gmra.mxu0 %v374
    %v399 = vpop.f32.mrf.mxu0
    %v400 = vadd.f32 %v368, %v399
    %401 = vmatmul.f32.gmra.mxu0 %v377
    %v402 = vpop.f32.mrf.mxu0
    %v403 = vadd.f32 %v368, %v402
    %404 = vdwg.mxu0
    %v405 = vtanh.pop %v397
    %v406 = vtanh.pop %v400
    %v407 = vtanh.pop %v403
    %411 = vrot.lane.b32.xlu0 %v261, 32
    %v412 = vpop.permute.xlu0 %411
    %413 = vrot.lane.b32.xlu0 %v262, 32
    %v414 = vpop.permute.xlu0 %413
    %415 = vrot.lane.b32.xlu0 %v263, 32
    %v416 = vpop.permute.xlu0 %415
    %423 = vrot.lane.b32.xlu0 %v333, 64
    %v424 = vpop.permute.xlu0 %423
    %425 = vrot.lane.b32.xlu0 %v334, 64
    %v426 = vpop.permute.xlu0 %425
    %427 = vrot.lane.b32.xlu0 %v335, 64
    %v428 = vpop.permute.xlu0 %427
    %435 = vrot.lane.b32.xlu0 %v405, 96
    %v436 = vpop.permute.xlu0 %435
    %437 = vrot.lane.b32.xlu0 %v406, 96
    %v438 = vpop.permute.xlu0 %437
    %439 = vrot.lane.b32.xlu0 %v407, 96
    %v440 = vpop.permute.xlu0 %439
    %v444 = vsel %vm153, %v189, %v412
    %v445 = vsel %vm153, %v190, %v414
    %v446 = vsel %vm153, %v191, %v416
    %vm447 = vcmask 523264
    %v448 = vsel %vm447, %v444, %v424
    %v449 = vsel %vm447, %v445, %v426
    %v450 = vsel %vm447, %v446, %v428
    %vm451 = vcmask 785408
    %v452 = vsel %vm451, %v448, %v436
    %v453 = vsel %vm451, %v449, %v438
    %v454 = vsel %vm451, %v450, %v440
    %vm455 = vcmask 793600
    %456 = vst.msk [vmem:[#allocation3] sm:$0xff] %vm455, %v452
    %457 = vst.msk [vmem:[#allocation3 + $0x8] sm:$0xff] %vm455, %v453
    %458 = vst.msk [vmem:[#allocation3 + $0x10] sm:$0xff] %vm455, %v454
    // Predicated region
    $region46: #{tpu_custom_call.1} parent=1 // pred_check
      _
    $region47: #{tpu_custom_call.1} parent=1 // pred_check_branch
      %460 = sbr.rel (0) target = $region49
    $region48: #{tpu_custom_call.1} parent=1 // pred_region
      %462 = vsyncadd [#allocation4], 0
      %s463 = sshll.u32 [#allocation3], 4
      %s464 = int_to_ptr.vmem [resolvable:$true] %s463
      %s465 = sshll.u32 %s11, 4
      %s466 = int_to_ptr.hbm [resolvable:$true] %s465
      %471 = dma.vmem_to_hbm [thread:$0]  %s464, 384, %s466, [#allocation4], 128, 128, 8
    $region49: #{tpu_custom_call.1} parent=1 // pred_fallthru
      _
    // Predicated region
    $region50: #{tpu_custom_call.1} parent=1 // pred_check
      _
    $region51: #{tpu_custom_call.1} parent=1 // pred_check_branch
      %473 = sbr.rel (0) target = $region53
    $region52: #{tpu_custom_call.1} parent=1 // pred_region
      %475 = dma.done [#allocation4], 384
    $region53: #{tpu_custom_call.1} parent=1 // pred_fallthru
      _
    %476 = vsyncpa [#allocation4], 1

</llo_original>
